<compile_context>
chip_gen: v7x
topology: tpu7x:2x2x1
jax: 0.10.0
libtpu: 0.0.40
codegen_flags: <defaults>
</compile_context>

<pallas_src>
import functools

import jax
import jax.numpy as jnp
from jax import lax
from jax.experimental import pallas as pl
from jax.experimental.pallas import tpu as pltpu


def _emb_kernel(x_ref, w_ref, b_ref, o_ref, *, P, S, N, Nq):
    """x_ref: (TB, S*Nq) VMEM; w_ref: (D*P,) SMEM; b_ref: (D,) SMEM;
    o_ref: (TB, D*N) VMEM — row-major over (D, N), so the wrapper reshape to
    (B, M, D, N) is free."""
    TB = x_ref.shape[0]
    D = b_ref.shape[0]

    xt = x_ref[...]  # (TB, S*Nq) f32 — one lane-dense load per step.

    # Tap p for output position n is
    #   x_pad[b, n*S + p] == xt[b, (p % S)*Nq + (n + p // S)]
    # i.e. a contiguous lane slice per tap; pre-slice the P taps once.
    taps = []
    for p in range(P):
        q, s = divmod(p, S)
        base = s * Nq + q
        taps.append(xt[:, base:base + N])          # (TB, N)

    # Unrolled VPU multiply-accumulate (D, P are small static ints).
    for d in range(D):
        acc = jnp.zeros((TB, N), jnp.float32)
        for p in range(P):
            acc = acc + w_ref[d * P + p] * taps[p]
        o_ref[:, d * N:(d + 1) * N] = (acc + b_ref[d]).astype(o_ref.dtype)


def embedding_forward(x, weight, bias, *, P=8, S=4, block_rows=256):
    """x: (B, M, L) f32. weight: (D, 1, P). bias: (D,). Returns (B, M, D, N)."""
    B, M, L = x.shape
    D = weight.shape[0]
    BM = B * M

    Lp = L + (P - S)                  # replicate-padded length
    N = (Lp - P) // S + 1             # conv output length (== L // S when L % S == 0)
    Nq = -(-Lp // S)                  # ceil(Lp / S)
    Lr = Nq * S

    # --- glue (layout only): replicate pad + deinterleave stride-S phases ---
    xf = x.reshape(BM, L).astype(jnp.float32)
    xp = jnp.pad(xf, ((0, 0), (0, Lr - L)), mode="edge")            # (BM, Lr)
    xt = xp.reshape(BM, Nq, S).transpose(0, 2, 1).reshape(BM, S * Nq)

    # Rows per grid step: multiple of 8 (sublane tiling) and amortizes the
    # per-step overhead; pad the row count up to a whole number of steps.
    TB = min(block_rows, BM)
    TB = -(-TB // 8) * 8
    G = -(-BM // TB)
    rows = G * TB
    if rows != BM:
        xt = jnp.pad(xt, ((0, rows - BM), (0, 0)))

    w_sm = weight.reshape(D * P).astype(jnp.float32)   # flat scalars in SMEM
    b_sm = bias.astype(jnp.float32)                    # (D,)

    kernel = functools.partial(_emb_kernel, P=P, S=S, N=N, Nq=Nq)
    out = pl.pallas_call(
        kernel,
        out_shape=jax.ShapeDtypeStruct((rows, D * N), jnp.float32),
        grid_spec=pl.GridSpec(
            grid=(G,),
            in_specs=[
                pl.BlockSpec((TB, S * Nq), lambda i: (i, 0)),
                pl.BlockSpec(memory_space=pltpu.MemorySpace.SMEM),
                pl.BlockSpec(memory_space=pltpu.MemorySpace.SMEM),
            ],
            out_specs=pl.BlockSpec((TB, D * N), lambda i: (i, 0)),
        ),
        compiler_params=pltpu.CompilerParams(
            dimension_semantics=("parallel",),
            vmem_limit_bytes=32 * 1024 * 1024,
        ),
    )(xt, w_sm, b_sm)

    return out[:BM].reshape(B, M, D, N)


def _reference_forward(x, weight, bias, *, P=8, S=4):
    """Pure-JAX reference using lax.conv_general_dilated (matches F.conv1d)."""
    B, M, L = x.shape
    x_flat = x.reshape(B * M, 1, L)
    x_pad = jnp.pad(x_flat, ((0, 0), (0, 0), (0, P - S)), mode="edge")
    out = lax.conv_general_dilated(
        x_pad, weight, window_strides=(S,), padding="VALID",
        dimension_numbers=("NCH", "OIH", "NCH"),
    ) + bias[None, :, None]
    N = out.shape[-1]
    return out.reshape(B, M, -1, N)


if __name__ == "__main__":
    P, S, D = 8, 4, 2
    B, M, L = 2, 4, 16

    key = jax.random.PRNGKey(0)
    kx, kw, kb = jax.random.split(key, 3)

    x = jax.random.normal(kx, (B, M, L), dtype=jnp.float32)
    # Deterministic Conv1d params (PyTorch-style uniform(-1/sqrt(fan_in), +)).
    fan_in = 1 * P
    bound = 1.0 / (fan_in ** 0.5)
    weight = jax.random.uniform(kw, (D, 1, P), minval=-bound, maxval=bound,
                                dtype=jnp.float32)
    bias = jax.random.uniform(kb, (D,), minval=-bound, maxval=bound,
                              dtype=jnp.float32)

    y = embedding_forward(x, weight, bias, P=P, S=S)
    y = jax.block_until_ready(y)

    y_ref = _reference_forward(x, weight, bias, P=P, S=S)
    assert y.shape == (B, M, D, L // S), y.shape
    assert jnp.allclose(y, y_ref, atol=1e-5, rtol=1e-5), \
        float(jnp.max(jnp.abs(y - y_ref)))

    print("KERNEL_OK")
</pallas_src>

<mosaic_0001>
module attributes {stable_mosaic.version = 11 : i64} {
  func.func @_emb_kernel(%arg0: i32, %arg1: memref<8x20xf32, #tpu.memory_space<vmem>>, %arg2: memref<16xf32, #tpu.memory_space<smem>>, %arg3: memref<2xf32, #tpu.memory_space<smem>>, %arg4: memref<8x8xf32, #tpu.memory_space<vmem>>) attributes {dimension_semantics = [#tpu.dimension_semantics<parallel>], iteration_bounds = array<i64: 1>, scalar_prefetch = 0 : i64, scratch_operands = 0 : i64, tpu.core_type = #tpu.core_type<tc>, window_params = [{transform_indices = @transform_0, window_bounds = array<i64: 8, 20>}, {transform_indices = @transform_1, window_bounds = array<i64: 16>}, {transform_indices = @transform_2, window_bounds = array<i64: 2>}, {transform_indices = @transform_3, window_bounds = array<i64: 8, 8>}]} {
    %c0 = arith.constant 0 : index
    %c0_0 = arith.constant 0 : index
    %0 = vector.load %arg1[%c0, %c0_0] : memref<8x20xf32, #tpu.memory_space<vmem>>, vector<8x20xf32>
    %1 = vector.extract_strided_slice %0 {offsets = [0, 0], sizes = [8, 4], strides = [1, 1]} : vector<8x20xf32> to vector<8x4xf32>
    %2 = vector.extract_strided_slice %0 {offsets = [0, 5], sizes = [8, 4], strides = [1, 1]} : vector<8x20xf32> to vector<8x4xf32>
    %3 = vector.extract_strided_slice %0 {offsets = [0, 10], sizes = [8, 4], strides = [1, 1]} : vector<8x20xf32> to vector<8x4xf32>
    %4 = vector.extract_strided_slice %0 {offsets = [0, 15], sizes = [8, 4], strides = [1, 1]} : vector<8x20xf32> to vector<8x4xf32>
    %5 = vector.extract_strided_slice %0 {offsets = [0, 1], sizes = [8, 4], strides = [1, 1]} : vector<8x20xf32> to vector<8x4xf32>
    %6 = vector.extract_strided_slice %0 {offsets = [0, 6], sizes = [8, 4], strides = [1, 1]} : vector<8x20xf32> to vector<8x4xf32>
    %7 = vector.extract_strided_slice %0 {offsets = [0, 11], sizes = [8, 4], strides = [1, 1]} : vector<8x20xf32> to vector<8x4xf32>
    %8 = vector.extract_strided_slice %0 {offsets = [0, 16], sizes = [8, 4], strides = [1, 1]} : vector<8x20xf32> to vector<8x4xf32>
    %cst = arith.constant 0.000000e+00 : f32
    %9 = vector.broadcast %cst : f32 to vector<8x4xf32>
    %c0_1 = arith.constant 0 : index
    %10 = memref.load %arg2[%c0_1] : memref<16xf32, #tpu.memory_space<smem>>
    %11 = vector.broadcast %10 : f32 to vector<8x4xf32>
    %12 = arith.mulf %11, %1 : vector<8x4xf32>
    %13 = arith.addf %9, %12 : vector<8x4xf32>
    %c1 = arith.constant 1 : index
    %14 = memref.load %arg2[%c1] : memref<16xf32, #tpu.memory_space<smem>>
    %15 = vector.broadcast %14 : f32 to vector<8x4xf32>
    %16 = arith.mulf %15, %2 : vector<8x4xf32>
    %17 = arith.addf %13, %16 : vector<8x4xf32>
    %c2 = arith.constant 2 : index
    %18 = memref.load %arg2[%c2] : memref<16xf32, #tpu.memory_space<smem>>
    %19 = vector.broadcast %18 : f32 to vector<8x4xf32>
    %20 = arith.mulf %19, %3 : vector<8x4xf32>
    %21 = arith.addf %17, %20 : vector<8x4xf32>
    %c3 = arith.constant 3 : index
    %22 = memref.load %arg2[%c3] : memref<16xf32, #tpu.memory_space<smem>>
    %23 = vector.broadcast %22 : f32 to vector<8x4xf32>
    %24 = arith.mulf %23, %4 : vector<8x4xf32>
    %25 = arith.addf %21, %24 : vector<8x4xf32>
    %c4 = arith.constant 4 : index
    %26 = memref.load %arg2[%c4] : memref<16xf32, #tpu.memory_space<smem>>
    %27 = vector.broadcast %26 : f32 to vector<8x4xf32>
    %28 = arith.mulf %27, %5 : vector<8x4xf32>
    %29 = arith.addf %25, %28 : vector<8x4xf32>
    %c5 = arith.constant 5 : index
    %30 = memref.load %arg2[%c5] : memref<16xf32, #tpu.memory_space<smem>>
    %31 = vector.broadcast %30 : f32 to vector<8x4xf32>
    %32 = arith.mulf %31, %6 : vector<8x4xf32>
    %33 = arith.addf %29, %32 : vector<8x4xf32>
    %c6 = arith.constant 6 : index
    %34 = memref.load %arg2[%c6] : memref<16xf32, #tpu.memory_space<smem>>
    %35 = vector.broadcast %34 : f32 to vector<8x4xf32>
    %36 = arith.mulf %35, %7 : vector<8x4xf32>
    %37 = arith.addf %33, %36 : vector<8x4xf32>
    %c7 = arith.constant 7 : index
    %38 = memref.load %arg2[%c7] : memref<16xf32, #tpu.memory_space<smem>>
    %39 = vector.broadcast %38 : f32 to vector<8x4xf32>
    %40 = arith.mulf %39, %8 : vector<8x4xf32>
    %41 = arith.addf %37, %40 : vector<8x4xf32>
    %c0_2 = arith.constant 0 : index
    %42 = memref.load %arg3[%c0_2] : memref<2xf32, #tpu.memory_space<smem>>
    %43 = vector.broadcast %42 : f32 to vector<8x4xf32>
    %44 = arith.addf %41, %43 : vector<8x4xf32>
    %c0_3 = arith.constant 0 : index
    %c0_4 = arith.constant 0 : index
    %45 = vector.load %arg4[%c0_3, %c0_4] : memref<8x8xf32, #tpu.memory_space<vmem>>, vector<8x4xf32>
    tpu.vector_store %arg4[%c0_3, %c0_4], %44 {strides = array<i32>} : memref<8x8xf32, #tpu.memory_space<vmem>>, vector<8x4xf32>,
    %cst_5 = arith.constant 0.000000e+00 : f32
    %46 = vector.broadcast %cst_5 : f32 to vector<8x4xf32>
    %c8 = arith.constant 8 : index
    %47 = memref.load %arg2[%c8] : memref<16xf32, #tpu.memory_space<smem>>
    %48 = vector.broadcast %47 : f32 to vector<8x4xf32>
    %49 = arith.mulf %48, %1 : vector<8x4xf32>
    %50 = arith.addf %46, %49 : vector<8x4xf32>
    %c9 = arith.constant 9 : index
    %51 = memref.load %arg2[%c9] : memref<16xf32, #tpu.memory_space<smem>>
    %52 = vector.broadcast %51 : f32 to vector<8x4xf32>
    %53 = arith.mulf %52, %2 : vector<8x4xf32>
    %54 = arith.addf %50, %53 : vector<8x4xf32>
    %c10 = arith.constant 10 : index
    %55 = memref.load %arg2[%c10] : memref<16xf32, #tpu.memory_space<smem>>
    %56 = vector.broadcast %55 : f32 to vector<8x4xf32>
    %57 = arith.mulf %56, %3 : vector<8x4xf32>
    %58 = arith.addf %54, %57 : vector<8x4xf32>
    %c11 = arith.constant 11 : index
    %59 = memref.load %arg2[%c11] : memref<16xf32, #tpu.memory_space<smem>>
    %60 = vector.broadcast %59 : f32 to vector<8x4xf32>
    %61 = arith.mulf %60, %4 : vector<8x4xf32>
    %62 = arith.addf %58, %61 : vector<8x4xf32>
    %c12 = arith.constant 12 : index
    %63 = memref.load %arg2[%c12] : memref<16xf32, #tpu.memory_space<smem>>
    %64 = vector.broadcast %63 : f32 to vector<8x4xf32>
    %65 = arith.mulf %64, %5 : vector<8x4xf32>
    %66 = arith.addf %62, %65 : vector<8x4xf32>
    %c13 = arith.constant 13 : index
    %67 = memref.load %arg2[%c13] : memref<16xf32, #tpu.memory_space<smem>>
    %68 = vector.broadcast %67 : f32 to vector<8x4xf32>
    %69 = arith.mulf %68, %6 : vector<8x4xf32>
    %70 = arith.addf %66, %69 : vector<8x4xf32>
    %c14 = arith.constant 14 : index
    %71 = memref.load %arg2[%c14] : memref<16xf32, #tpu.memory_space<smem>>
    %72 = vector.broadcast %71 : f32 to vector<8x4xf32>
    %73 = arith.mulf %72, %7 : vector<8x4xf32>
    %74 = arith.addf %70, %73 : vector<8x4xf32>
    %c15 = arith.constant 15 : index
    %75 = memref.load %arg2[%c15] : memref<16xf32, #tpu.memory_space<smem>>
    %76 = vector.broadcast %75 : f32 to vector<8x4xf32>
    %77 = arith.mulf %76, %8 : vector<8x4xf32>
    %78 = arith.addf %74, %77 : vector<8x4xf32>
    %c1_6 = arith.constant 1 : index
    %79 = memref.load %arg3[%c1_6] : memref<2xf32, #tpu.memory_space<smem>>
    %80 = vector.broadcast %79 : f32 to vector<8x4xf32>
    %81 = arith.addf %78, %80 : vector<8x4xf32>
    %c0_7 = arith.constant 0 : index
    %c4_8 = arith.constant 4 : index
    %82 = vector.load %arg4[%c0_7, %c4_8] : memref<8x8xf32, #tpu.memory_space<vmem>>, vector<8x4xf32>
    tpu.vector_store %arg4[%c0_7, %c4_8], %81 {strides = array<i32>} : memref<8x8xf32, #tpu.memory_space<vmem>>, vector<8x4xf32>,
    return
  }
  func.func @transform_0(%arg0: i32) -> (i32, i32) {
    %c0_i32 = arith.constant 0 : i32
    %c0_i32_0 = arith.constant 0 : i32
    return %arg0, %c0_i32 : i32, i32
  }
  func.func @transform_1(%arg0: i32) -> i32 {
    %c0_i32 = arith.constant 0 : i32
    %c0_i32_0 = arith.constant 0 : i32
    return %c0_i32 : i32
  }
  func.func @transform_2(%arg0: i32) -> i32 {
    %c0_i32 = arith.constant 0 : i32
    %c0_i32_0 = arith.constant 0 : i32
    return %c0_i32 : i32
  }
  func.func @transform_3(%arg0: i32) -> (i32, i32) {
    %c0_i32 = arith.constant 0 : i32
    %c0_i32_0 = arith.constant 0 : i32
    return %arg0, %c0_i32 : i32, i32
  }
}

</mosaic_0001>

<llo_original>
// kernel: tpu_custom_call.1
$region0: #{tpu_custom_call.1}
  #allocation0 [shape = 'u32[]', space=smem, size = 0x4, offset = 0x4, fixed_abs, tag = 'smem constant byte address 0x4 - core index']
  #allocation1 [shape = 'u32[144,128]{1,0:T(1,128)}', space=vmem, size = 0x12000, scoped, tag = 'internal scratch']
  %s0 = inlined_call_operand.hbm [shape: f32[8,20], index: 0, kind: input, shape index: {}]
  %s1 = inlined_call_operand.vmem [shape: f32[16], index: 1, kind: input, shape index: {}]
  %s2 = inlined_call_operand.vmem [shape: f32[2], index: 2, kind: input, shape index: {}]
  %s3 = inlined_call_operand.hbm [shape: f32[8,8], index: 3, kind: output, shape index: {}]
  %s4 = sld [smem:[#allocation0]]
  $region34: #{tpu_custom_call.1} parent=0
    _
  %s6 = ssub.s32 1, %s4
  %s7 = scalar_select 0, %s6, %s4
  $region1: #{tpu_custom_call.1} parent=0
    #allocation2 [shape = 'u8[4096]{0}', space=vmem, size = 0x1000, scoped, tag = 'input window, operand 0, single buffered']
    #allocation3 [shape = 's32[1]{0}', space=sflag, size = 0x4, scoped, tag = 'scoped memory for tpu_custom_call.1']
    #allocation4 [shape = 's32[1]{0}', space=sflag, size = 0x4, scoped, tag = 'scoped memory for tpu_custom_call.1']
    #allocation5 [shape = 's32[1]{0}', space=sflag, size = 0x4, scoped, tag = 'scoped memory for tpu_custom_call.1']
    #allocation6 [shape = 'u8[512]{0}', space=smem, size = 0x200, scoped, tag = 'input window, operand 1, single buffered']
    #allocation7 [shape = 'u8[512]{0}', space=smem, size = 0x200, scoped, tag = 'input window, operand 2, single buffered']
    #allocation8 [shape = 's32[1]{0}', space=sflag, size = 0x4, scoped, tag = 'scoped memory for tpu_custom_call.1']
    #allocation9 [shape = 'u8[4096]{0}', space=vmem, size = 0x1000, scoped, tag = 'output window, operand 0, single buffered']
    %8 = vsyncpa [#allocation3], 0
    %9 = vsyncpa [#allocation5], 0
    %10 = vsyncpa [#allocation8], 0
    %11 = vsyncpa [#allocation4], 0
    // Predicated region
    $region2: #{tpu_custom_call.1} parent=1 // pred_check
      _
    $region3: #{tpu_custom_call.1} parent=1 // pred_check_branch
      %13 = sbr.rel (0) target = $region5
    $region4: #{tpu_custom_call.1} parent=1 // pred_region
      %s15 = ssub.s32 128, 128
      %16 = vsyncadd [#allocation3], %s15
      %s18 = sshll.u32 [#allocation2], 4
      %s19 = int_to_ptr.vmem [resolvable:$true] %s18
      %21 = dma.hbm_to_vmem [thread:$0]  %s0, 128, %s19, [#allocation3]
    $region5: #{tpu_custom_call.1} parent=1 // pred_fallthru
      _
    // Predicated region
    $region6: #{tpu_custom_call.1} parent=1 // pred_check
      _
    $region7: #{tpu_custom_call.1} parent=1 // pred_check_branch
      %23 = sbr.rel (0) target = $region9
    $region8: #{tpu_custom_call.1} parent=1 // pred_region
      %s25 = ssub.s32 16, 16
      %26 = vsyncadd [#allocation5], %s25
      %s28 = sshll.u32 %s1, 4
      %s29 = int_to_ptr.vmem [resolvable:$true] %s28
      %31 = dma.vmem_to_smem %s29, 16, [#allocation6], [#allocation5]
    $region9: #{tpu_custom_call.1} parent=1 // pred_fallthru
      _
    // Predicated region
    $region10: #{tpu_custom_call.1} parent=1 // pred_check
      _
    $region11: #{tpu_custom_call.1} parent=1 // pred_check_branch
      %33 = sbr.rel (0) target = $region13
    $region12: #{tpu_custom_call.1} parent=1 // pred_region
      %s35 = ssub.s32 16, 16
      %36 = vsyncadd [#allocation8], %s35
      %s38 = sshll.u32 %s2, 4
      %s39 = int_to_ptr.vmem [resolvable:$true] %s38
      %41 = dma.vmem_to_smem %s39, 16, [#allocation7], [#allocation8]
    $region13: #{tpu_custom_call.1} parent=1 // pred_fallthru
      _
    // Predicated region
    $region14: #{tpu_custom_call.1} parent=1 // pred_check
      _
    $region15: #{tpu_custom_call.1} parent=1 // pred_check_branch
      %43 = sbr.rel (0) target = $region17
    $region16: #{tpu_custom_call.1} parent=1 // pred_region
      %44 = dma.done [#allocation3], 128
    $region17: #{tpu_custom_call.1} parent=1 // pred_fallthru
      _
    // Predicated region
    $region18: #{tpu_custom_call.1} parent=1 // pred_check
      _
    $region19: #{tpu_custom_call.1} parent=1 // pred_check_branch
      %46 = sbr.rel (0) target = $region21
    $region20: #{tpu_custom_call.1} parent=1 // pred_region
      %47 = dma.done [#allocation5], 16
    $region21: #{tpu_custom_call.1} parent=1 // pred_fallthru
      _
    // Predicated region
    $region22: #{tpu_custom_call.1} parent=1 // pred_check
      _
    $region23: #{tpu_custom_call.1} parent=1 // pred_check_branch
      %49 = sbr.rel (0) target = $region25
    $region24: #{tpu_custom_call.1} parent=1 // pred_region
      %50 = dma.done [#allocation8], 16
    $region25: #{tpu_custom_call.1} parent=1 // pred_fallthru
      _
    %51 = sfence
    %v52 = vld [vmem:[#allocation2] sm:$0xff]
    %s53 = sld [smem:[#allocation6]]
    %v54 = vstv %s53
    %v55 = vmul.f32 %v54, %v52
    %v56 = vadd.f32 %v55, 0.0
    %s57 = sld [smem:[#allocation6 + $0x1]]
    %v58 = vstv %s57
    %v59 = vmul.f32 %v58, %v52
    %61 = vrot.lane.b32.xlu0 %v59, 123
    %v62 = vpop.permute.xlu0 %61
    %v64 = vadd.f32 %v56, %v62
    %s65 = sld [smem:[#allocation6 + $0x2]]
    %v66 = vstv %s65
    %v67 = vmul.f32 %v66, %v52
    %69 = vrot.lane.b32.xlu0 %v67, 118
    %v70 = vpop.permute.xlu0 %69
    %v72 = vadd.f32 %v64, %v70
    %s73 = sld [smem:[#allocation6 + $0x3]]
    %v74 = vstv %s73
    %v75 = vmul.f32 %v74, %v52
    %77 = vrot.lane.b32.xlu0 %v75, 113
    %v78 = vpop.permute.xlu0 %77
    %v80 = vadd.f32 %v72, %v78
    %s81 = sld [smem:[#allocation6 + $0x4]]
    %v82 = vstv %s81
    %v83 = vmul.f32 %v82, %v52
    %85 = vrot.lane.b32.xlu0 %v83, 127
    %v86 = vpop.permute.xlu0 %85
    %v88 = vadd.f32 %v80, %v86
    %s89 = sld [smem:[#allocation6 + $0x5]]
    %v90 = vstv %s89
    %v91 = vmul.f32 %v90, %v52
    %93 = vrot.lane.b32.xlu0 %v91, 122
    %v94 = vpop.permute.xlu0 %93
    %v96 = vadd.f32 %v88, %v94
    %s97 = sld [smem:[#allocation6 + $0x6]]
    %v98 = vstv %s97
    %v99 = vmul.f32 %v98, %v52
    %101 = vrot.lane.b32.xlu0 %v99, 117
    %v102 = vpop.permute.xlu0 %101
    %v104 = vadd.f32 %v96, %v102
    %s105 = sld [smem:[#allocation6 + $0x7]]
    %v106 = vstv %s105
    %v107 = vmul.f32 %v106, %v52
    %109 = vrot.lane.b32.xlu0 %v107, 112
    %v110 = vpop.permute.xlu0 %109
    %v112 = vadd.f32 %v104, %v110
    %s113 = sld [smem:[#allocation7]]
    %v114 = vstv %s113
    %v115 = vadd.f32 %v112, %v114
    %vm116 = vcmask 31744
    %117 = vst.msk [vmem:[#allocation9] sm:$0xff] %vm116, %v115
    %s118 = sld [smem:[#allocation6 + $0x8]]
    %v119 = vstv %s118
    %v120 = vmul.f32 %v119, %v52
    %v121 = vadd.f32 %v120, 0.0
    %s122 = sld [smem:[#allocation6 + $0x9]]
    %v123 = vstv %s122
    %v124 = vmul.f32 %v123, %v52
    %126 = vrot.lane.b32.xlu0 %v124, 123
    %v127 = vpop.permute.xlu0 %126
    %v129 = vadd.f32 %v121, %v127
    %s130 = sld [smem:[#allocation6 + $0xa]]
    %v131 = vstv %s130
    %v132 = vmul.f32 %v131, %v52
    %134 = vrot.lane.b32.xlu0 %v132, 118
    %v135 = vpop.permute.xlu0 %134
    %v137 = vadd.f32 %v129, %v135
    %s138 = sld [smem:[#allocation6 + $0xb]]
    %v139 = vstv %s138
    %v140 = vmul.f32 %v139, %v52
    %142 = vrot.lane.b32.xlu0 %v140, 113
    %v143 = vpop.permute.xlu0 %142
    %v145 = vadd.f32 %v137, %v143
    %s146 = sld [smem:[#allocation6 + $0xc]]
    %v147 = vstv %s146
    %v148 = vmul.f32 %v147, %v52
    %150 = vrot.lane.b32.xlu0 %v148, 127
    %v151 = vpop.permute.xlu0 %150
    %v153 = vadd.f32 %v145, %v151
    %s154 = sld [smem:[#allocation6 + $0xd]]
    %v155 = vstv %s154
    %v156 = vmul.f32 %v155, %v52
    %158 = vrot.lane.b32.xlu0 %v156, 122
    %v159 = vpop.permute.xlu0 %158
    %v161 = vadd.f32 %v153, %v159
    %s162 = sld [smem:[#allocation6 + $0xe]]
    %v163 = vstv %s162
    %v164 = vmul.f32 %v163, %v52
    %166 = vrot.lane.b32.xlu0 %v164, 117
    %v167 = vpop.permute.xlu0 %166
    %v169 = vadd.f32 %v161, %v167
    %s170 = sld [smem:[#allocation6 + $0xf]]
    %v171 = vstv %s170
    %v172 = vmul.f32 %v171, %v52
    %174 = vrot.lane.b32.xlu0 %v172, 112
    %v175 = vpop.permute.xlu0 %174
    %v177 = vadd.f32 %v169, %v175
    %s178 = sld [smem:[#allocation7 + $0x1]]
    %v179 = vstv %s178
    %v180 = vadd.f32 %v177, %v179
    %182 = vrot.lane.b32.xlu0 %v180, 4
    %v183 = vpop.permute.xlu0 %182
    %vm185 = vcmask 64544
    %186 = vst.msk [vmem:[#allocation9] sm:$0xff] %vm185, %v183
    // Predicated region
    $region26: #{tpu_custom_call.1} parent=1 // pred_check
      _
    $region27: #{tpu_custom_call.1} parent=1 // pred_check_branch
      %188 = sbr.rel (0) target = $region29
    $region28: #{tpu_custom_call.1} parent=1 // pred_region
      %s190 = ssub.s32 128, 128
      %191 = vsyncadd [#allocation4], %s190
      %s193 = sshll.u32 [#allocation9], 4
      %s194 = int_to_ptr.vmem [resolvable:$true] %s193
      %196 = dma.vmem_to_hbm [thread:$0]  %s194, 128, %s3, [#allocation4]
    $region29: #{tpu_custom_call.1} parent=1 // pred_fallthru
      _
    // Predicated region
    $region30: #{tpu_custom_call.1} parent=1 // pred_check
      _
    $region31: #{tpu_custom_call.1} parent=1 // pred_check_branch
      %198 = sbr.rel (0) target = $region33
    $region32: #{tpu_custom_call.1} parent=1 // pred_region
      %199 = dma.done [#allocation4], 128
    $region33: #{tpu_custom_call.1} parent=1 // pred_fallthru
      _
    %200 = vsyncpa [#allocation3], 1
    %201 = vsyncpa [#allocation4], 1
    %202 = vsyncpa [#allocation5], 1
    %203 = vsyncpa [#allocation8], 1

</llo_original>
